<compile_context>
chip_gen: v6e
topology: v6e:2x2x1
jax: 0.10.0
libtpu: 0.0.40
codegen_flags: <defaults>
</compile_context>

<pallas_src>
import functools
import math

import jax
import jax.numpy as jnp
from jax.experimental import pallas as pl
from jax.experimental.pallas import tpu as pltpu


def _round_up(x, m):
    return (x + m - 1) // m * m


def _head_kernel(x_ref, w_ref, gamma_ref, o_ref, *, eps, inv_h):
    # x_ref:     (TM, H)  tile of tokens (native dtype, e.g. f32 or bf16)
    # w_ref:     (H, H)   dense weight pre-transposed to (in, out) layout
    # gamma_ref: (1, H)   LayerNorm weight
    x = x_ref[...]
    w = w_ref[...]

    # Linear (no bias): MXU matmul in the operand dtype, f32 accumulation.
    y = jnp.dot(x, w, preferred_element_type=jnp.float32)

    # Exact GELU (erf-based), matching torch.nn.functional.gelu default.
    # erf uses the EUP slot and hides under the MXU once tiles are large.
    y = 0.5 * y * (1.0 + jax.lax.erf(y * (1.0 / math.sqrt(2.0))))

    # LayerNorm over the last dim, weight only (no bias).
    mean = jnp.sum(y, axis=-1, keepdims=True) * inv_h
    centered = y - mean
    var = jnp.sum(centered * centered, axis=-1, keepdims=True) * inv_h
    scale = jax.lax.rsqrt(var + eps)
    y = centered * scale * gamma_ref[...].astype(jnp.float32)

    o_ref[...] = y.astype(o_ref.dtype)


@functools.partial(jax.jit, static_argnames=("eps", "tile_m"))
def modernbert_prediction_head(hidden_states, dense_weight, norm_weight,
                               *, eps=1e-5, tile_m=256):
    """hidden_states: [B, S, H]; dense_weight: [H, H] (PyTorch (out, in) layout);
    norm_weight: [H]."""
    assert tile_m % 8 == 0, "tile_m must be a multiple of 8 (sublane)"
    B, S, H = hidden_states.shape
    M = B * S
    x2d = hidden_states.reshape(M, H)

    # Hoist the weight transpose out of the kernel: (out, in) -> (in, out) so
    # the MXU consumes it in natural (K, N) layout; done once by XLA.
    w_t = jnp.transpose(dense_weight)
    gamma2d = norm_weight.reshape(1, H)

    # Tile size: big enough to fill the MXU, but don't over-pad tiny inputs.
    tm = min(tile_m, _round_up(M, 8))
    m_pad = _round_up(M, tm)
    if m_pad != M:
        x2d = jnp.pad(x2d, ((0, m_pad - M), (0, 0)))

    grid = (m_pad // tm,)

    # Advisory cost estimate for the surrounding XLA schedule.
    out_itemsize = jnp.dtype(hidden_states.dtype).itemsize
    cost = pl.CostEstimate(
        flops=2 * m_pad * H * H,
        transcendentals=m_pad * H,
        bytes_accessed=(m_pad * H * x2d.dtype.itemsize            # read x
                        + H * H * w_t.dtype.itemsize              # read weight once
                        + H * jnp.dtype(norm_weight.dtype).itemsize
                        + m_pad * H * out_itemsize))              # write out

    # VMEM working set: double-buffered x/out tiles + resident weight + f32 temps.
    # Only raise the scoped limit when the default (~32 MiB) would be exceeded.
    vmem_need = (2 * tm * H * x2d.dtype.itemsize
                 + 2 * tm * H * out_itemsize
                 + 2 * H * H * w_t.dtype.itemsize
                 + 4 * tm * H * 4)
    vmem_limit = None
    if vmem_need > 30 * 1024 * 1024:
        vmem_limit = int(min(vmem_need + (4 << 20), 64 * 1024 * 1024))

    kernel = functools.partial(_head_kernel, eps=eps, inv_h=1.0 / H)
    out2d = pl.pallas_call(
        kernel,
        out_shape=jax.ShapeDtypeStruct((m_pad, H), hidden_states.dtype),
        grid_spec=pltpu.PrefetchScalarGridSpec(
            num_scalar_prefetch=0,
            grid=grid,
            in_specs=[
                pl.BlockSpec((tm, H), lambda i: (i, 0)),   # x tile
                pl.BlockSpec((H, H), lambda i: (0, 0)),    # dense weight (resident)
                pl.BlockSpec((1, H), lambda i: (0, 0)),    # LN weight (resident)
            ],
            out_specs=pl.BlockSpec((tm, H), lambda i: (i, 0)),
        ),
        compiler_params=pltpu.CompilerParams(
            dimension_semantics=("parallel",),
            vmem_limit_bytes=vmem_limit),
        cost_estimate=cost,
    )(x2d, w_t, gamma2d)

    if m_pad != M:
        out2d = out2d[:M]
    return out2d.reshape(B, S, H)


def _reference(hidden_states, dense_weight, norm_weight, eps=1e-5):
    y = jnp.einsum("bsh,oh->bso", hidden_states.astype(jnp.float32),
                   dense_weight.astype(jnp.float32))
    y = jax.nn.gelu(y, approximate=False)
    mean = jnp.mean(y, axis=-1, keepdims=True)
    var = jnp.mean(jnp.square(y - mean), axis=-1, keepdims=True)
    y = (y - mean) / jnp.sqrt(var + eps) * norm_weight.astype(jnp.float32)
    return y.astype(hidden_states.dtype)


if __name__ == "__main__":
    hidden = 128
    key = jax.random.PRNGKey(0)
    k_x1, k_x2, k_w = jax.random.split(key, 3)

    # Deterministic parameter init (synthetic, not a checkpoint).
    dense_weight = jax.random.normal(k_w, (hidden, hidden), jnp.float32) * 0.02
    norm_weight = jnp.ones((hidden,), jnp.float32)  # LayerNorm weight init = 1

    # Case 1: small, tile-aligned token count (f32).
    x1 = jax.random.normal(k_x1, (2, 8, hidden), jnp.float32)
    out1 = jax.block_until_ready(
        modernbert_prediction_head(x1, dense_weight, norm_weight))
    ref1 = _reference(x1, dense_weight, norm_weight)
    assert out1.shape == x1.shape
    assert jnp.allclose(out1, ref1, atol=1e-5, rtol=1e-5), "mismatch (case 1)"

    # Case 2: token count not a multiple of the tile (exercises pad/slice path).
    x2 = jax.random.normal(k_x2, (3, 5, hidden), jnp.float32)
    out2 = jax.block_until_ready(
        modernbert_prediction_head(x2, dense_weight, norm_weight))
    ref2 = _reference(x2, dense_weight, norm_weight)
    assert out2.shape == x2.shape
    assert jnp.allclose(out2, ref2, atol=1e-5, rtol=1e-5), "mismatch (case 2)"

    # Case 3: bf16 inputs/weights (native-dtype MXU path, f32 accumulation).
    x3 = x1.astype(jnp.bfloat16)
    w3 = dense_weight.astype(jnp.bfloat16)
    g3 = norm_weight.astype(jnp.bfloat16)
    out3 = jax.block_until_ready(modernbert_prediction_head(x3, w3, g3))
    ref3 = _reference(x3, w3, g3)
    assert out3.shape == x3.shape
    assert jnp.allclose(out3.astype(jnp.float32), ref3.astype(jnp.float32),
                        atol=2e-2, rtol=2e-2), "mismatch (case 3, bf16)"

    print("KERNEL_OK")
</pallas_src>

<mosaic_0001>
module attributes {stable_mosaic.version = 11 : i64} {
  func.func @_head_kernel(%arg0: i32, %arg1: memref<16x128xf32, #tpu.memory_space<vmem>>, %arg2: memref<128x128xf32, #tpu.memory_space<vmem>>, %arg3: memref<1x128xf32, #tpu.memory_space<vmem>>, %arg4: memref<16x128xf32, #tpu.memory_space<vmem>>) attributes {dimension_semantics = [#tpu.dimension_semantics<parallel>], iteration_bounds = array<i64: 1>, scalar_prefetch = 0 : i64, scratch_operands = 0 : i64, tpu.core_type = #tpu.core_type<tc>, window_params = [{transform_indices = @transform_0, window_bounds = array<i64: 16, 128>}, {pipeline_mode = #tpu.pipeline_mode<synchronous>, transform_indices = @transform_1, window_bounds = array<i64: 128, 128>}, {pipeline_mode = #tpu.pipeline_mode<synchronous>, transform_indices = @transform_2, window_bounds = array<i64: 1, 128>}, {transform_indices = @transform_3, window_bounds = array<i64: 16, 128>}]} {
    %c0 = arith.constant 0 : index
    %c0_0 = arith.constant 0 : index
    %0 = vector.load %arg1[%c0, %c0_0] : memref<16x128xf32, #tpu.memory_space<vmem>>, vector<16x128xf32>
    %c0_1 = arith.constant 0 : index
    %c0_2 = arith.constant 0 : index
    %1 = vector.load %arg2[%c0_1, %c0_2] : memref<128x128xf32, #tpu.memory_space<vmem>>, vector<128x128xf32>
    %cst = arith.constant dense<0.000000e+00> : vector<16x128xf32>
    %2 = tpu.matmul %0, %1, %cst {dimension_numbers = #tpu.dot_dimension_numbers<[1], [0], [0], [1], [0, 0, 1, 1], [], []>} : vector<16x128xf32>, vector<128x128xf32>, vector<16x128xf32> -> vector<16x128xf32>
    %cst_3 = arith.constant 5.000000e-01 : f32
    %3 = vector.broadcast %cst_3 : f32 to vector<16x128xf32>
    %4 = arith.mulf %3, %2 : vector<16x128xf32>
    %cst_4 = arith.constant 0.707106769 : f32
    %5 = vector.broadcast %cst_4 : f32 to vector<16x128xf32>
    %6 = arith.mulf %2, %5 : vector<16x128xf32>
    %7 = math.erf %6 : vector<16x128xf32>
    %cst_5 = arith.constant 1.000000e+00 : f32
    %8 = vector.broadcast %cst_5 : f32 to vector<16x128xf32>
    %9 = arith.addf %8, %7 : vector<16x128xf32>
    %10 = arith.mulf %4, %9 : vector<16x128xf32>
    %cst_6 = arith.constant dense<0.000000e+00> : vector<16xf32>
    %11 = vector.multi_reduction <add>, %10, %cst_6 [1] : vector<16x128xf32> to vector<16xf32>
    %12 = vector.shape_cast %11 : vector<16xf32> to vector<16x1xf32>
    %cst_7 = arith.constant 7.812500e-03 : f32
    %13 = vector.broadcast %cst_7 : f32 to vector<16x1xf32>
    %14 = arith.mulf %12, %13 : vector<16x1xf32>
    %15 = vector.broadcast %14 : vector<16x1xf32> to vector<16x128xf32>
    %16 = arith.subf %10, %15 : vector<16x128xf32>
    %17 = arith.mulf %16, %16 : vector<16x128xf32>
    %cst_8 = arith.constant dense<0.000000e+00> : vector<16xf32>
    %18 = vector.multi_reduction <add>, %17, %cst_8 [1] : vector<16x128xf32> to vector<16xf32>
    %19 = vector.shape_cast %18 : vector<16xf32> to vector<16x1xf32>
    %cst_9 = arith.constant 7.812500e-03 : f32
    %20 = vector.broadcast %cst_9 : f32 to vector<16x1xf32>
    %21 = arith.mulf %19, %20 : vector<16x1xf32>
    %cst_10 = arith.constant 9.99999974E-6 : f32
    %22 = vector.broadcast %cst_10 : f32 to vector<16x1xf32>
    %23 = arith.addf %21, %22 : vector<16x1xf32>
    %24 = math.rsqrt %23 : vector<16x1xf32>
    %25 = vector.broadcast %24 : vector<16x1xf32> to vector<16x128xf32>
    %26 = arith.mulf %16, %25 : vector<16x128xf32>
    %c0_11 = arith.constant 0 : index
    %c0_12 = arith.constant 0 : index
    %27 = vector.load %arg3[%c0_11, %c0_12] : memref<1x128xf32, #tpu.memory_space<vmem>>, vector<1x128xf32>
    %28 = vector.broadcast %27 : vector<1x128xf32> to vector<16x128xf32>
    %29 = arith.mulf %26, %28 : vector<16x128xf32>
    %c0_13 = arith.constant 0 : index
    %c0_14 = arith.constant 0 : index
    %30 = vector.load %arg4[%c0_13, %c0_14] : memref<16x128xf32, #tpu.memory_space<vmem>>, vector<16x128xf32>
    tpu.vector_store %arg4[%c0_13, %c0_14], %29 {strides = array<i32>} : memref<16x128xf32, #tpu.memory_space<vmem>>, vector<16x128xf32>,
    return
  }
  func.func @transform_0(%arg0: i32) -> (i32, i32) {
    %c0_i32 = arith.constant 0 : i32
    %c0_i32_0 = arith.constant 0 : i32
    return %arg0, %c0_i32 : i32, i32
  }
  func.func @transform_1(%arg0: i32) -> (i32, i32) {
    %c0_i32 = arith.constant 0 : i32
    %c0_i32_0 = arith.constant 0 : i32
    %c0_i32_1 = arith.constant 0 : i32
    return %c0_i32, %c0_i32_0 : i32, i32
  }
  func.func @transform_2(%arg0: i32) -> (i32, i32) {
    %c0_i32 = arith.constant 0 : i32
    %c0_i32_0 = arith.constant 0 : i32
    %c0_i32_1 = arith.constant 0 : i32
    return %c0_i32, %c0_i32_0 : i32, i32
  }
  func.func @transform_3(%arg0: i32) -> (i32, i32) {
    %c0_i32 = arith.constant 0 : i32
    %c0_i32_0 = arith.constant 0 : i32
    return %arg0, %c0_i32 : i32, i32
  }
}

</mosaic_0001>

<llo_original>
// kernel: modernbert_prediction_head.1
$region0: #{modernbert_prediction_head.1}
  #allocation0 [shape = 'u32[]', space=smem, size = 0x4, offset = 0x4, fixed_abs, tag = 'smem constant byte address 0x4 - core index']
  #allocation1 [shape = 'u32[144,128]{1,0:T(1,128)}', space=vmem, size = 0x12000, scoped, tag = 'internal scratch']
  %s0 = inlined_call_operand.vmem [shape: f32[16,128], index: 0, kind: input, shape index: {}]
  %s1 = inlined_call_operand.vmem [shape: f32[128,128], index: 1, kind: input, shape index: {}]
  %s2 = inlined_call_operand.vmem [shape: f32[1,128], index: 2, kind: input, shape index: {}]
  %s3 = inlined_call_operand.hbm [shape: f32[16,128], index: 3, kind: output, shape index: {}]
  %s4 = sld [smem:[#allocation0]]
  $region22: #{modernbert_prediction_head.1} parent=0
    _
  %s6 = ssub.s32 1, %s4
  %s7 = scalar_select 0, %s6, %s4
  $region1: #{modernbert_prediction_head.1} parent=0
    #allocation2 [shape = 'u8[8192]{0}', space=vmem, size = 0x2000, scoped, tag = 'output window, operand 0, single buffered']
    #allocation3 [shape = 's32[1]{0}', space=sflag, size = 0x4, scoped, tag = 'scoped memory for modernbert_prediction_head.1']
    %8 = vsyncpa [#allocation3], 0
    // Predicated region
    $region2: #{modernbert_prediction_head.1} parent=1 // pred_check
      _
    $region3: #{modernbert_prediction_head.1} parent=1 // pred_check_branch
      %10 = sbr.rel (0) target = $region5
    $region4: #{modernbert_prediction_head.1} parent=1 // pred_region
      _
    $region5: #{modernbert_prediction_head.1} parent=1 // pred_fallthru
      _
    // Predicated region
    $region6: #{modernbert_prediction_head.1} parent=1 // pred_check
      _
    $region7: #{modernbert_prediction_head.1} parent=1 // pred_check_branch
      %12 = sbr.rel (0) target = $region9
    $region8: #{modernbert_prediction_head.1} parent=1 // pred_region
      _
    $region9: #{modernbert_prediction_head.1} parent=1 // pred_fallthru
      _
    // Predicated region
    $region10: #{modernbert_prediction_head.1} parent=1 // pred_check
      _
    $region11: #{modernbert_prediction_head.1} parent=1 // pred_check_branch
      %14 = sbr.rel (0) target = $region13
    $region12: #{modernbert_prediction_head.1} parent=1 // pred_region
      _
    $region13: #{modernbert_prediction_head.1} parent=1 // pred_fallthru
      _
    %v15 = vld [vmem:[%s0] sm:$0xff]
    %v16 = vld [vmem:[%s0 + $0x8] sm:$0xff]
    %v17 = vld [vmem:[%s1] sm:$0xff]
    %v18 = vld [vmem:[%s1 + $0x8] sm:$0xff]
    %v19 = vld [vmem:[%s1 + $0x10] sm:$0xff]
    %v20 = vld [vmem:[%s1 + $0x18] sm:$0xff]
    %v21 = vld [vmem:[%s1 + $0x20] sm:$0xff]
    %v22 = vld [vmem:[%s1 + $0x28] sm:$0xff]
    %v23 = vld [vmem:[%s1 + $0x30] sm:$0xff]
    %v24 = vld [vmem:[%s1 + $0x38] sm:$0xff]
    %v25 = vld [vmem:[%s1 + $0x40] sm:$0xff]
    %v26 = vld [vmem:[%s1 + $0x48] sm:$0xff]
    %v27 = vld [vmem:[%s1 + $0x50] sm:$0xff]
    %v28 = vld [vmem:[%s1 + $0x58] sm:$0xff]
    %v29 = vld [vmem:[%s1 + $0x60] sm:$0xff]
    %v30 = vld [vmem:[%s1 + $0x68] sm:$0xff]
    %v31 = vld [vmem:[%s1 + $0x70] sm:$0xff]
    %v32 = vld [vmem:[%s1 + $0x78] sm:$0xff]
    %33 = vmatprep.subr.mxu0 0.0
    %34 = vmatpush1.msra.mxu0 %v32
    %35 = vmatprep.subr.mxu0 0.0
    %36 = vmatpush1.msra.mxu0 %v31
    %37 = vmatprep.subr.mxu0 0.0
    %38 = vmatpush1.msra.mxu0 %v30
    %39 = vmatprep.subr.mxu0 0.0
    %40 = vmatpush1.msra.mxu0 %v29
    %41 = vmatprep.subr.mxu0 0.0
    %42 = vmatpush1.msra.mxu0 %v28
    %43 = vmatprep.subr.mxu0 0.0
    %44 = vmatpush1.msra.mxu0 %v27
    %45 = vmatprep.subr.mxu0 0.0
    %46 = vmatpush1.msra.mxu0 %v26
    %47 = vmatprep.subr.mxu0 0.0
    %48 = vmatpush1.msra.mxu0 %v25
    %49 = vmatprep.subr.mxu0 0.0
    %50 = vmatpush1.msra.mxu0 %v24
    %51 = vmatprep.subr.mxu0 0.0
    %52 = vmatpush1.msra.mxu0 %v23
    %53 = vmatprep.subr.mxu0 0.0
    %54 = vmatpush1.msra.mxu0 %v22
    %55 = vmatprep.subr.mxu0 0.0
    %56 = vmatpush1.msra.mxu0 %v21
    %57 = vmatprep.subr.mxu0 0.0
    %58 = vmatpush1.msra.mxu0 %v20
    %59 = vmatprep.subr.mxu0 0.0
    %60 = vmatpush1.msra.mxu0 %v19
    %61 = vmatprep.subr.mxu0 0.0
    %62 = vmatpush1.msra.mxu0 %v18
    %63 = vmatprep.subr.mxu0 0.0
    %64 = vmatpush1.msra.mxu0 %v17
    %65 = vmatprep.subr.mxu0 0.0
    %66 = vmatpush2.msra.mxu0 0.0
    %67 = vmatprep.subr.mxu0 0.0
    %68 = vmatpush2.msra.mxu0 0.0
    %69 = vmatprep.subr.mxu0 0.0
    %70 = vmatpush2.msra.mxu0 0.0
    %71 = vmatprep.subr.mxu0 0.0
    %72 = vmatpush2.msra.mxu0 0.0
    %73 = vmatprep.subr.mxu0 0.0
    %74 = vmatpush2.msra.mxu0 0.0
    %75 = vmatprep.subr.mxu0 0.0
    %76 = vmatpush2.msra.mxu0 0.0
    %77 = vmatprep.subr.mxu0 0.0
    %78 = vmatpush2.msra.mxu0 0.0
    %79 = vmatprep.subr.mxu0 0.0
    %80 = vmatpush2.msra.mxu0 0.0
    %81 = vmatprep.subr.mxu0 0.0
    %82 = vmatpush2.msra.mxu0 0.0
    %83 = vmatprep.subr.mxu0 0.0
    %84 = vmatpush2.msra.mxu0 0.0
    %85 = vmatprep.subr.mxu0 0.0
    %86 = vmatpush2.msra.mxu0 0.0
    %87 = vmatprep.subr.mxu0 0.0
    %88 = vmatpush2.msra.mxu0 0.0
    %89 = vmatprep.subr.mxu0 0.0
    %90 = vmatpush2.msra.mxu0 0.0
    %91 = vmatprep.subr.mxu0 0.0
    %92 = vmatpush2.msra.mxu0 0.0
    %93 = vmatprep.subr.mxu0 0.0
    %94 = vmatpush2.msra.mxu0 0.0
    %95 = vmatprep.subr.mxu0 0.0
    %96 = vmatpush2.msra.mxu0 0.0
    %97 = vmatprep.mubr.f32.mxu0 0.0
    %98 = vmatmul.mubr.f32.gmra.mxu0 %v15
    %v99 = vpop.f32.mrf.mxu0
    %v100 = vadd.f32 0.0, %v99
    %v101 = vpop.f32.mrf.mxu0
    %102 = vmatprep.mubr.f32.mxu0 0.0
    %103 = vmatmul.mubr.f32.gmra.mxu0 %v16
    %v104 = vpop.f32.mrf.mxu0
    %v105 = vadd.f32 0.0, %v104
    %v106 = vpop.f32.mrf.mxu0
    %107 = vdwg.mxu0
    %v108 = vmul.f32 %v100, 0.5
    %v109 = vmul.f32 %v105, 0.5
    %v110 = vmul.f32 %v100, 0.70710677
    %v111 = vmul.f32 %v105, 0.70710677
    %v112 = verf.f32.pop %v110
    %v113 = verf.f32.pop %v111
    %v114 = vadd.f32 %v112, 1.0
    %v115 = vadd.f32 %v113, 1.0
    %v116 = vmul.f32 %v108, %v114
    %v117 = vmul.f32 %v109, %v115
    %118 = vadd.xlane.f32.xlu0 %v116
    %v119 = vpop.xlane.xlu0 %118
    %120 = vadd.xlane.f32.xlu0 %v117
    %v121 = vpop.xlane.xlu0 %120
    %v122 = vmul.f32 %v119, 0.0078125
    %v123 = vmul.f32 %v121, 0.0078125
    %v124 = vsub.f32 %v116, %v122
    %v125 = vsub.f32 %v117, %v123
    %v126 = vmul.f32 %v124, %v124
    %v127 = vmul.f32 %v125, %v125
    %128 = vadd.xlane.f32.xlu0 %v126
    %v129 = vpop.xlane.xlu0 %128
    %130 = vadd.xlane.f32.xlu0 %v127
    %v131 = vpop.xlane.xlu0 %130
    %v132 = vmul.f32 %v129, 0.0078125
    %v133 = vmul.f32 %v131, 0.0078125
    %v134 = vadd.f32 %v132, 1e-05
    %v135 = vadd.f32 %v133, 1e-05
    %v136 = vrsqrt.pop %v134
    %v137 = vrsqrt.pop %v135
    %v138 = vmul.f32 %v124, %v136
    %v139 = vmul.f32 %v125, %v137
    %v140 = vld [vmem:[%s2] sm:$0x1]
    %v142 = vlaneseq
    %v143 = vshrl.u32 %v142, 7
    %v144 = vsub.s32 0, %v143
    %v145 = vrot.slane %v140, %v144
    %v147 = vmul.f32 %v138, %v145
    %v148 = vmul.f32 %v139, %v145
    %149 = vst [vmem:[#allocation2] sm:$0xff] %v147
    %150 = vst [vmem:[#allocation2 + $0x8] sm:$0xff] %v148
    // Predicated region
    $region14: #{modernbert_prediction_head.1} parent=1 // pred_check
      _
    $region15: #{modernbert_prediction_head.1} parent=1 // pred_check_branch
      %152 = sbr.rel (0) target = $region17
    $region16: #{modernbert_prediction_head.1} parent=1 // pred_region
      %s154 = ssub.s32 256, 256
      %155 = vsyncadd [#allocation3], %s154
      %s156 = sshll.u32 [#allocation2], 4
      %s157 = int_to_ptr.vmem [resolvable:$true] %s156
      %162 = dma.vmem_to_hbm [thread:$0]  %s157, 256, %s3, [#allocation3], 128, 128, 8
    $region17: #{modernbert_prediction_head.1} parent=1 // pred_fallthru
      _
    // Predicated region
    $region18: #{modernbert_prediction_head.1} parent=1 // pred_check
      _
    $region19: #{modernbert_prediction_head.1} parent=1 // pred_check_branch
      %164 = sbr.rel (0) target = $region21
    $region20: #{modernbert_prediction_head.1} parent=1 // pred_region
      %165 = dma.done [#allocation3], 256
    $region21: #{modernbert_prediction_head.1} parent=1 // pred_fallthru
      _
    %166 = vsyncpa [#allocation3], 1

</llo_original>
